<compile_context>
chip_gen: v7x
topology: tpu7x:2x2x1
jax: 0.10.0
libtpu: 0.0.40
codegen_flags: <defaults>
</compile_context>

<pallas_src>
import functools

import jax
import jax.numpy as jnp
from jax.experimental import pallas as pl
from jax.experimental.pallas import tpu as pltpu


def _round_up(x, m):
    return (x + m - 1) // m * m


def _decoder_kernel(ids_ref, h0_ref, c0_ref,
                    emb_gates_ref, w_hh0_ref, w_l_ref, b_l_ref,
                    w_fc_ref, b_fc_ref,
                    pred_ref, h_ref, c_ref,
                    *, num_layers, hidden_size, vocab_size):
    """One decode step per grid iteration; h/c carried in the resident output blocks.

    ids_ref      : (1, B, 1) int32        token ids for this step (streamed per t)
    h0_ref/c0_ref: (L, B, H)               initial states (read only at t == 0)
    emb_gates_ref: (V, 4H)                 embedding @ w_ih_0^T + (b_ih_0+b_hh_0), gate-permuted
    w_hh0_ref    : (H, 4H)                 layer-0 hidden->hidden (transposed, gate-permuted)
    w_l_ref      : (max(L-1,1), 2H, 4H)    layers>=1 fused [w_ih; w_hh] (transposed, permuted)
    b_l_ref      : (max(L-1,1), 1, 4H)     layers>=1 combined biases (permuted)
    w_fc_ref     : (H, O_pad)              final linear weight (transposed, zero-padded)
    b_fc_ref     : (1, O_pad)              final linear bias (zero-padded)
    pred_ref     : (1, B, O_pad)           this step's predictions
    h_ref/c_ref  : (L, B, H)               state carry (VMEM-resident across the whole grid)
    """
    H = hidden_size
    t = pl.program_id(0)

    @pl.when(t == 0)
    def _():
        h_ref[...] = h0_ref[...]
        c_ref[...] = c0_ref[...]

    ids = ids_ref[0]                                        # (B, 1) int32
    B = ids.shape[0]

    # Embedding gather + layer-0 input gates + bias fused as ONE one-hot MXU matmul.
    # (Out-of-range ids would give an all-zero row; caller guarantees ids in [0, V).)
    onehot = (jax.lax.broadcasted_iota(jnp.int32, (B, vocab_size), 1) == ids)

    def lstm_cell(gates, c_prev):
        # Gate columns pre-permuted to (i, f, o, g): one contiguous sigmoid pass over
        # 3H lanes + one tanh pass over H lanes.
        sig = jax.nn.sigmoid(gates[:, :3 * H])
        g_g = jnp.tanh(gates[:, 3 * H:])
        i_g = sig[:, 0 * H:1 * H]
        f_g = sig[:, 1 * H:2 * H]
        o_g = sig[:, 2 * H:3 * H]
        c_new = f_g * c_prev + i_g * g_g
        h_new = o_g * jnp.tanh(c_new)
        return h_new, c_new

    # ---- layer 0 ----
    gates = (jnp.dot(onehot.astype(jnp.float32), emb_gates_ref[...],
                     preferred_element_type=jnp.float32)
             + jnp.dot(h_ref[0], w_hh0_ref[...], preferred_element_type=jnp.float32))
    h_new, c_new = lstm_cell(gates, c_ref[0])
    h_ref[0] = h_new
    c_ref[0] = c_new
    x = h_new

    # ---- layers >= 1 (fused [x; h_prev] @ [w_ih; w_hh]) ----
    # TODO(synk): nn.Dropout / LSTM inter-layer dropout are identity here (eval mode).
    for l in range(1, num_layers):
        xh = jnp.concatenate([x, h_ref[l]], axis=-1)        # (B, 2H)
        gates = (jnp.dot(xh, w_l_ref[l - 1], preferred_element_type=jnp.float32)
                 + b_l_ref[l - 1])
        h_new, c_new = lstm_cell(gates, c_ref[l])
        h_ref[l] = h_new
        c_ref[l] = c_new
        x = h_new

    # ---- fc(outputs).squeeze(0): lane-dense padded store ----
    pred_ref[0] = (jnp.dot(x, w_fc_ref[...], preferred_element_type=jnp.float32)
                   + b_fc_ref[...])


def prepare_params(params, num_layers):
    """One-time weight prep (NOT per decode step): gate-permute to (i,f,o,g), transpose
    to (K, N), fold embedding + layer-0 bias into emb_gates, fuse per-layer
    [w_ih; w_hh], zero-pad the fc output dim to a lane multiple."""
    H4, H = params["w_hh_0"].shape                           # (4H, H)
    O = params["fc_w"].shape[0]
    O_pad = _round_up(O, 128)

    # PyTorch gate order (i, f, g, o) -> (i, f, o, g)
    perm = jnp.concatenate([jnp.arange(0, 2 * H),
                            jnp.arange(3 * H, 4 * H),
                            jnp.arange(2 * H, 3 * H)])

    def wt(name, l):            # (4H, K): permute gate rows, transpose -> (K, 4H)
        return params[f"{name}_{l}"][perm].T

    def bias(l):                # combined bias, permuted (4H,)
        return (params[f"b_ih_{l}"] + params[f"b_hh_{l}"])[perm]

    emb_gates = params["embedding"] @ wt("w_ih", 0) + bias(0)[None, :]    # (V, 4H)
    w_hh0 = wt("w_hh", 0)                                                 # (H, 4H)

    if num_layers > 1:
        w_l = jnp.stack([jnp.concatenate([wt("w_ih", l), wt("w_hh", l)], axis=0)
                         for l in range(1, num_layers)])                  # (L-1, 2H, 4H)
        b_l = jnp.stack([bias(l)[None, :] for l in range(1, num_layers)]) # (L-1, 1, 4H)
    else:
        # Placeholders (never read in the kernel) so the pallas_call arg list is static.
        w_l = jnp.zeros((1, 2 * H, H4), jnp.float32)
        b_l = jnp.zeros((1, 1, H4), jnp.float32)

    w_fc = jnp.zeros((H, O_pad), jnp.float32).at[:, :O].set(params["fc_w"].T)
    b_fc = jnp.zeros((1, O_pad), jnp.float32).at[:, :O].set(params["fc_b"][None, :])

    prep = dict(emb_gates=emb_gates, w_hh0=w_hh0, w_l=w_l, b_l=b_l,
                w_fc=w_fc, b_fc=b_fc)
    return jax.tree_util.tree_map(lambda a: jnp.asarray(a, jnp.float32), prep)


@functools.partial(jax.jit, static_argnums=(4,), donate_argnums=(2, 3))
def decoder_generate(prep, tokens, hidden, cell, output_size):
    """Runs Decoder.forward for every row of `tokens` (shape (T, B)) in ONE fused
    pallas_call: weights are DMA'd to VMEM once, hidden/cell never leave VMEM between
    steps. Returns (preds (T, B, O), hidden (L, B, H), cell (L, B, H))."""
    T, B = tokens.shape
    L, _, H = hidden.shape
    V, G = prep["emb_gates"].shape                           # G = 4H
    O_pad = prep["w_fc"].shape[1]

    ids = tokens.astype(jnp.int32).reshape(T, B, 1)

    kernel = functools.partial(_decoder_kernel, num_layers=L, hidden_size=H,
                               vocab_size=V)

    def resident(shape):                                     # whole array, DMA'd once
        zeros = (0,) * len(shape)
        return pl.BlockSpec(shape, lambda t, _z=zeros: _z)

    in_specs = [
        pl.BlockSpec((1, B, 1), lambda t: (t, 0, 0)),        # ids: streamed per step
        resident((L, B, H)),                                 # hidden_0
        resident((L, B, H)),                                 # cell_0
        resident(prep["emb_gates"].shape),
        resident(prep["w_hh0"].shape),
        resident(prep["w_l"].shape),
        resident(prep["b_l"].shape),
        resident(prep["w_fc"].shape),
        resident(prep["b_fc"].shape),
    ]
    out_specs = (
        pl.BlockSpec((1, B, O_pad), lambda t: (t, 0, 0)),    # per-step predictions
        resident((L, B, H)),                                 # hidden carry / final
        resident((L, B, H)),                                 # cell carry / final
    )

    flops = 2 * T * B * (V * G + H * G + (L - 1) * 2 * H * G + H * O_pad)
    transcendentals = T * B * L * 5 * H
    bytes_accessed = (sum(int(prep[k].size) * 4
                          for k in ("emb_gates", "w_hh0", "w_l", "b_l", "w_fc", "b_fc"))
                      + 4 * L * B * H * 4 + T * B * 4 + T * B * O_pad * 4)

    preds, h_out, c_out = pl.pallas_call(
        kernel,
        grid=(T,),
        out_shape=(jax.ShapeDtypeStruct((T, B, O_pad), jnp.float32),
                   jax.ShapeDtypeStruct((L, B, H), jnp.float32),
                   jax.ShapeDtypeStruct((L, B, H), jnp.float32)),
        in_specs=in_specs,
        out_specs=out_specs,
        # hidden -> h_out, cell -> c_out: reuse the same HBM buffers every call.
        input_output_aliases={1: 1, 2: 2},
        compiler_params=pltpu.CompilerParams(
            dimension_semantics=("arbitrary",)),             # sequential carry over t
        cost_estimate=pl.CostEstimate(flops=flops,
                                      transcendentals=transcendentals,
                                      bytes_accessed=bytes_accessed),
    )(ids, hidden, cell, prep["emb_gates"], prep["w_hh0"], prep["w_l"], prep["b_l"],
      prep["w_fc"], prep["b_fc"])

    return preds[..., :output_size], h_out, c_out


def decoder_forward(prep, x_tokens, hidden, cell, output_size):
    """Exact equivalent of Decoder.forward(x, hidden, cell) in eval mode (T == 1)."""
    preds, h_out, c_out = decoder_generate(prep, x_tokens[None, :], hidden, cell,
                                           output_size)
    return preds[0], h_out, c_out


def init_params(key, input_size, embedding_size, hidden_size, output_size, num_layers):
    """Deterministic synthetic parameters matching the nn.Module shapes."""
    params = {}
    n_keys = 3 + 4 * num_layers
    keys = jax.random.split(key, n_keys)
    k = iter(keys)

    params["embedding"] = jax.random.normal(
        next(k), (input_size, embedding_size), jnp.float32)

    bound = 1.0 / jnp.sqrt(hidden_size).astype(jnp.float32)
    for l in range(num_layers):
        in_dim = embedding_size if l == 0 else hidden_size
        params[f"w_ih_{l}"] = jax.random.uniform(
            next(k), (4 * hidden_size, in_dim), jnp.float32, -bound, bound)
        params[f"w_hh_{l}"] = jax.random.uniform(
            next(k), (4 * hidden_size, hidden_size), jnp.float32, -bound, bound)
        params[f"b_ih_{l}"] = jax.random.uniform(
            next(k), (4 * hidden_size,), jnp.float32, -bound, bound)
        params[f"b_hh_{l}"] = jax.random.uniform(
            next(k), (4 * hidden_size,), jnp.float32, -bound, bound)

    params["fc_w"] = jax.random.uniform(
        next(k), (output_size, hidden_size), jnp.float32, -bound, bound)
    params["fc_b"] = jax.random.uniform(
        next(k), (output_size,), jnp.float32, -bound, bound)
    return params


if __name__ == "__main__":
    # Decoder(input_size=50, embedding_size=16, hidden_size=32, output_size=50,
    #         num_layers=2, p=0.1) — eval mode.
    V, E, H, O, L = 50, 16, 32, 50, 2
    B, T = 8, 8          # B=8 fills the sublane dimension (perf review: batch >= 8)

    root = jax.random.PRNGKey(0)
    k_param, k_x, k_h, k_c = jax.random.split(root, 4)

    params = init_params(k_param, V, E, H, O, L)
    prep = prepare_params(params, L)             # one-time; reused across generations

    tokens = jax.random.randint(k_x, (T, B), 0, V, dtype=jnp.int32)
    hidden = jax.random.normal(k_h, (L, B, H), jnp.float32)
    cell = jax.random.normal(k_c, (L, B, H), jnp.float32)

    # Fused T-step decode (== T sequential Decoder.forward calls on the given ids).
    preds_seq, h_seq, c_seq = decoder_generate(prep, tokens, hidden, cell, O)
    jax.block_until_ready((preds_seq, h_seq, c_seq))
    assert preds_seq.shape == (T, B, O)
    assert h_seq.shape == (L, B, H)
    assert c_seq.shape == (L, B, H)

    # Single-step Decoder.forward (same kernel, T = 1).
    preds, h_new, c_new = decoder_forward(prep, tokens[0], h_seq, c_seq, O)
    jax.block_until_ready((preds, h_new, c_new))
    assert preds.shape == (B, O)
    assert h_new.shape == (L, B, H)
    assert c_new.shape == (L, B, H)
    print("KERNEL_OK")
</pallas_src>

<mosaic_0001>
module attributes {stable_mosaic.version = 11 : i64} {
  func.func @_decoder_kernel(%arg0: i32, %arg1: memref<1x8x1xi32, #tpu.memory_space<vmem>>, %arg2: memref<2x8x32xf32, #tpu.memory_space<vmem>>, %arg3: memref<2x8x32xf32, #tpu.memory_space<vmem>>, %arg4: memref<50x128xf32, #tpu.memory_space<vmem>>, %arg5: memref<32x128xf32, #tpu.memory_space<vmem>>, %arg6: memref<1x64x128xf32, #tpu.memory_space<vmem>>, %arg7: memref<1x1x128xf32, #tpu.memory_space<vmem>>, %arg8: memref<32x128xf32, #tpu.memory_space<vmem>>, %arg9: memref<1x128xf32, #tpu.memory_space<vmem>>, %arg10: memref<1x8x128xf32, #tpu.memory_space<vmem>>, %arg11: memref<2x8x32xf32, #tpu.memory_space<vmem>>, %arg12: memref<2x8x32xf32, #tpu.memory_space<vmem>>) attributes {dimension_semantics = [#tpu.dimension_semantics<arbitrary>], iteration_bounds = array<i64: 8>, scalar_prefetch = 0 : i64, scratch_operands = 0 : i64, tpu.core_type = #tpu.core_type<tc>, window_params = [{transform_indices = @transform_0, window_bounds = array<i64: 1, 8, 1>}, {pipeline_mode = #tpu.pipeline_mode<synchronous>, transform_indices = @transform_1, window_bounds = array<i64: 2, 8, 32>}, {pipeline_mode = #tpu.pipeline_mode<synchronous>, transform_indices = @transform_2, window_bounds = array<i64: 2, 8, 32>}, {pipeline_mode = #tpu.pipeline_mode<synchronous>, transform_indices = @transform_3, window_bounds = array<i64: 50, 128>}, {pipeline_mode = #tpu.pipeline_mode<synchronous>, transform_indices = @transform_4, window_bounds = array<i64: 32, 128>}, {pipeline_mode = #tpu.pipeline_mode<synchronous>, transform_indices = @transform_5, window_bounds = array<i64: 1, 64, 128>}, {pipeline_mode = #tpu.pipeline_mode<synchronous>, transform_indices = @transform_6, window_bounds = array<i64: 1, 1, 128>}, {pipeline_mode = #tpu.pipeline_mode<synchronous>, transform_indices = @transform_7, window_bounds = array<i64: 32, 128>}, {pipeline_mode = #tpu.pipeline_mode<synchronous>, transform_indices = @transform_8, window_bounds = array<i64: 1, 128>}, {transform_indices = @transform_9, window_bounds = array<i64: 1, 8, 128>}, {pipeline_mode = #tpu.pipeline_mode<synchronous>, transform_indices = @transform_10, window_bounds = array<i64: 2, 8, 32>}, {pipeline_mode = #tpu.pipeline_mode<synchronous>, transform_indices = @transform_11, window_bounds = array<i64: 2, 8, 32>}]} {
    %c0_i32 = arith.constant 0 : i32
    %0 = arith.cmpi eq, %arg0, %c0_i32 : i32
    %1 = arith.extui %0 : i1 to i32
    %c0_i32_0 = arith.constant 0 : i32
    %2 = arith.cmpi ne, %1, %c0_i32_0 : i32
    scf.if %2 {
      %c0_48 = arith.constant 0 : index
      %c0_49 = arith.constant 0 : index
      %c0_50 = arith.constant 0 : index
      %83 = vector.load %arg2[%c0_48, %c0_49, %c0_50] : memref<2x8x32xf32, #tpu.memory_space<vmem>>, vector<2x8x32xf32>
      %c0_51 = arith.constant 0 : index
      %c0_52 = arith.constant 0 : index
      %c0_53 = arith.constant 0 : index
      %84 = vector.load %arg11[%c0_51, %c0_52, %c0_53] : memref<2x8x32xf32, #tpu.memory_space<vmem>>, vector<2x8x32xf32>
      tpu.vector_store %arg11[%c0_51, %c0_52, %c0_53], %83 {strides = array<i32>} : memref<2x8x32xf32, #tpu.memory_space<vmem>>, vector<2x8x32xf32>,
      %c0_54 = arith.constant 0 : index
      %c0_55 = arith.constant 0 : index
      %c0_56 = arith.constant 0 : index
      %85 = vector.load %arg3[%c0_54, %c0_55, %c0_56] : memref<2x8x32xf32, #tpu.memory_space<vmem>>, vector<2x8x32xf32>
      %c0_57 = arith.constant 0 : index
      %c0_58 = arith.constant 0 : index
      %c0_59 = arith.constant 0 : index
      %86 = vector.load %arg12[%c0_57, %c0_58, %c0_59] : memref<2x8x32xf32, #tpu.memory_space<vmem>>, vector<2x8x32xf32>
      tpu.vector_store %arg12[%c0_57, %c0_58, %c0_59], %85 {strides = array<i32>} : memref<2x8x32xf32, #tpu.memory_space<vmem>>, vector<2x8x32xf32>,
    } else {
    }
    %c0 = arith.constant 0 : index
    %c0_1 = arith.constant 0 : index
    %c0_2 = arith.constant 0 : index
    %3 = vector.load %arg1[%c0, %c0_1, %c0_2] : memref<1x8x1xi32, #tpu.memory_space<vmem>>, vector<1x8x1xi32>
    %4 = vector.shape_cast %3 : vector<1x8x1xi32> to vector<8x1xi32>
    %5 = tpu.iota {dimensions = array<i32: 1>} : vector<8x50xi32>
    %6 = vector.broadcast %4 : vector<8x1xi32> to vector<8x50xi32>
    %7 = arith.cmpi eq, %5, %6 : vector<8x50xi32>
    %8 = arith.extui %7 : vector<8x50xi1> to vector<8x50xi32>
    %9 = arith.sitofp %8 : vector<8x50xi32> to vector<8x50xf32>
    %c0_3 = arith.constant 0 : index
    %c0_4 = arith.constant 0 : index
    %10 = vector.load %arg4[%c0_3, %c0_4] : memref<50x128xf32, #tpu.memory_space<vmem>>, vector<50x128xf32>
    %cst = arith.constant dense<0.000000e+00> : vector<8x128xf32>
    %11 = tpu.matmul %9, %10, %cst {dimension_numbers = #tpu.dot_dimension_numbers<[1], [0], [0], [1], [0, 0, 1, 1], [], []>} : vector<8x50xf32>, vector<50x128xf32>, vector<8x128xf32> -> vector<8x128xf32>
    %c0_5 = arith.constant 0 : index
    %c0_6 = arith.constant 0 : index
    %c0_7 = arith.constant 0 : index
    %12 = vector.load %arg11[%c0_5, %c0_6, %c0_7] : memref<2x8x32xf32, #tpu.memory_space<vmem>>, vector<1x8x32xf32>
    %13 = vector.shape_cast %12 : vector<1x8x32xf32> to vector<8x32xf32>
    %c0_8 = arith.constant 0 : index
    %c0_9 = arith.constant 0 : index
    %14 = vector.load %arg5[%c0_8, %c0_9] : memref<32x128xf32, #tpu.memory_space<vmem>>, vector<32x128xf32>
    %cst_10 = arith.constant dense<0.000000e+00> : vector<8x128xf32>
    %15 = tpu.matmul %13, %14, %cst_10 {dimension_numbers = #tpu.dot_dimension_numbers<[1], [0], [0], [1], [0, 0, 1, 1], [], []>} : vector<8x32xf32>, vector<32x128xf32>, vector<8x128xf32> -> vector<8x128xf32>
    %16 = arith.addf %11, %15 : vector<8x128xf32>
    %c0_11 = arith.constant 0 : index
    %c0_12 = arith.constant 0 : index
    %c0_13 = arith.constant 0 : index
    %17 = vector.load %arg12[%c0_11, %c0_12, %c0_13] : memref<2x8x32xf32, #tpu.memory_space<vmem>>, vector<1x8x32xf32>
    %18 = vector.shape_cast %17 : vector<1x8x32xf32> to vector<8x32xf32>
    %19 = vector.extract_strided_slice %16 {offsets = [0, 0], sizes = [8, 96], strides = [1, 1]} : vector<8x128xf32> to vector<8x96xf32>
    %20 = arith.negf %19 : vector<8x96xf32>
    %21 = math.exp %20 : vector<8x96xf32>
    %cst_14 = arith.constant 1.000000e+00 : f32
    %22 = vector.broadcast %cst_14 : f32 to vector<8x96xf32>
    %23 = arith.addf %22, %21 : vector<8x96xf32>
    %24 = arith.divf %22, %23 : vector<8x96xf32>
    %25 = vector.extract_strided_slice %16 {offsets = [0, 96], sizes = [8, 32], strides = [1, 1]} : vector<8x128xf32> to vector<8x32xf32>
    %26 = math.tanh %25 : vector<8x32xf32>
    %27 = vector.extract_strided_slice %24 {offsets = [0, 0], sizes = [8, 32], strides = [1, 1]} : vector<8x96xf32> to vector<8x32xf32>
    %28 = vector.extract_strided_slice %24 {offsets = [0, 32], sizes = [8, 32], strides = [1, 1]} : vector<8x96xf32> to vector<8x32xf32>
    %29 = vector.extract_strided_slice %24 {offsets = [0, 64], sizes = [8, 32], strides = [1, 1]} : vector<8x96xf32> to vector<8x32xf32>
    %30 = arith.mulf %28, %18 : vector<8x32xf32>
    %31 = arith.mulf %27, %26 : vector<8x32xf32>
    %32 = arith.addf %30, %31 : vector<8x32xf32>
    %33 = math.tanh %32 : vector<8x32xf32>
    %34 = arith.mulf %29, %33 : vector<8x32xf32>
    %c0_15 = arith.constant 0 : index
    %c0_16 = arith.constant 0 : index
    %c0_17 = arith.constant 0 : index
    %35 = vector.load %arg11[%c0_15, %c0_16, %c0_17] : memref<2x8x32xf32, #tpu.memory_space<vmem>>, vector<1x8x32xf32>
    %36 = vector.shape_cast %35 : vector<1x8x32xf32> to vector<8x32xf32>
    %37 = vector.shape_cast %34 : vector<8x32xf32> to vector<1x8x32xf32>
    tpu.vector_store %arg11[%c0_15, %c0_16, %c0_17], %37 {strides = array<i32>} : memref<2x8x32xf32, #tpu.memory_space<vmem>>, vector<1x8x32xf32>,
    %c0_18 = arith.constant 0 : index
    %c0_19 = arith.constant 0 : index
    %c0_20 = arith.constant 0 : index
    %38 = vector.load %arg12[%c0_18, %c0_19, %c0_20] : memref<2x8x32xf32, #tpu.memory_space<vmem>>, vector<1x8x32xf32>
    %39 = vector.shape_cast %38 : vector<1x8x32xf32> to vector<8x32xf32>
    %40 = vector.shape_cast %32 : vector<8x32xf32> to vector<1x8x32xf32>
    tpu.vector_store %arg12[%c0_18, %c0_19, %c0_20], %40 {strides = array<i32>} : memref<2x8x32xf32, #tpu.memory_space<vmem>>, vector<1x8x32xf32>,
    %c1 = arith.constant 1 : index
    %c0_21 = arith.constant 0 : index
    %c0_22 = arith.constant 0 : index
    %41 = vector.load %arg11[%c1, %c0_21, %c0_22] : memref<2x8x32xf32, #tpu.memory_space<vmem>>, vector<1x8x32xf32>
    %42 = vector.shape_cast %41 : vector<1x8x32xf32> to vector<8x32xf32>
    %43 = tpu.concatenate %34, %42 in 1 : vector<8x32xf32>, vector<8x32xf32> -> vector<8x64xf32>
    %c0_23 = arith.constant 0 : index
    %c0_24 = arith.constant 0 : index
    %c0_25 = arith.constant 0 : index
    %44 = vector.load %arg6[%c0_23, %c0_24, %c0_25] : memref<1x64x128xf32, #tpu.memory_space<vmem>>, vector<1x64x128xf32>
    %45 = vector.shape_cast %44 : vector<1x64x128xf32> to vector<64x128xf32>
    %cst_26 = arith.constant dense<0.000000e+00> : vector<8x128xf32>
    %46 = tpu.matmul %43, %45, %cst_26 {dimension_numbers = #tpu.dot_dimension_numbers<[1], [0], [0], [1], [0, 0, 1, 1], [], []>} : vector<8x64xf32>, vector<64x128xf32>, vector<8x128xf32> -> vector<8x128xf32>
    %c0_27 = arith.constant 0 : index
    %c0_28 = arith.constant 0 : index
    %c0_29 = arith.constant 0 : index
    %47 = vector.load %arg7[%c0_27, %c0_28, %c0_29] : memref<1x1x128xf32, #tpu.memory_space<vmem>>, vector<1x1x128xf32>
    %48 = vector.shape_cast %47 : vector<1x1x128xf32> to vector<1x128xf32>
    %49 = vector.broadcast %48 : vector<1x128xf32> to vector<8x128xf32>
    %50 = arith.addf %46, %49 : vector<8x128xf32>
    %c1_30 = arith.constant 1 : index
    %c0_31 = arith.constant 0 : index
    %c0_32 = arith.constant 0 : index
    %51 = vector.load %arg12[%c1_30, %c0_31, %c0_32] : memref<2x8x32xf32, #tpu.memory_space<vmem>>, vector<1x8x32xf32>
    %52 = vector.shape_cast %51 : vector<1x8x32xf32> to vector<8x32xf32>
    %53 = vector.extract_strided_slice %50 {offsets = [0, 0], sizes = [8, 96], strides = [1, 1]} : vector<8x128xf32> to vector<8x96xf32>
    %54 = arith.negf %53 : vector<8x96xf32>
    %55 = math.exp %54 : vector<8x96xf32>
    %cst_33 = arith.constant 1.000000e+00 : f32
    %56 = vector.broadcast %cst_33 : f32 to vector<8x96xf32>
    %57 = arith.addf %56, %55 : vector<8x96xf32>
    %58 = arith.divf %56, %57 : vector<8x96xf32>
    %59 = vector.extract_strided_slice %50 {offsets = [0, 96], sizes = [8, 32], strides = [1, 1]} : vector<8x128xf32> to vector<8x32xf32>
    %60 = math.tanh %59 : vector<8x32xf32>
    %61 = vector.extract_strided_slice %58 {offsets = [0, 0], sizes = [8, 32], strides = [1, 1]} : vector<8x96xf32> to vector<8x32xf32>
    %62 = vector.extract_strided_slice %58 {offsets = [0, 32], sizes = [8, 32], strides = [1, 1]} : vector<8x96xf32> to vector<8x32xf32>
    %63 = vector.extract_strided_slice %58 {offsets = [0, 64], sizes = [8, 32], strides = [1, 1]} : vector<8x96xf32> to vector<8x32xf32>
    %64 = arith.mulf %62, %52 : vector<8x32xf32>
    %65 = arith.mulf %61, %60 : vector<8x32xf32>
    %66 = arith.addf %64, %65 : vector<8x32xf32>
    %67 = math.tanh %66 : vector<8x32xf32>
    %68 = arith.mulf %63, %67 : vector<8x32xf32>
    %c1_34 = arith.constant 1 : index
    %c0_35 = arith.constant 0 : index
    %c0_36 = arith.constant 0 : index
    %69 = vector.load %arg11[%c1_34, %c0_35, %c0_36] : memref<2x8x32xf32, #tpu.memory_space<vmem>>, vector<1x8x32xf32>
    %70 = vector.shape_cast %69 : vector<1x8x32xf32> to vector<8x32xf32>
    %71 = vector.shape_cast %68 : vector<8x32xf32> to vector<1x8x32xf32>
    tpu.vector_store %arg11[%c1_34, %c0_35, %c0_36], %71 {strides = array<i32>} : memref<2x8x32xf32, #tpu.memory_space<vmem>>, vector<1x8x32xf32>,
    %c1_37 = arith.constant 1 : index
    %c0_38 = arith.constant 0 : index
    %c0_39 = arith.constant 0 : index
    %72 = vector.load %arg12[%c1_37, %c0_38, %c0_39] : memref<2x8x32xf32, #tpu.memory_space<vmem>>, vector<1x8x32xf32>
    %73 = vector.shape_cast %72 : vector<1x8x32xf32> to vector<8x32xf32>
    %74 = vector.shape_cast %66 : vector<8x32xf32> to vector<1x8x32xf32>
    tpu.vector_store %arg12[%c1_37, %c0_38, %c0_39], %74 {strides = array<i32>} : memref<2x8x32xf32, #tpu.memory_space<vmem>>, vector<1x8x32xf32>,
    %c0_40 = arith.constant 0 : index
    %c0_41 = arith.constant 0 : index
    %75 = vector.load %arg8[%c0_40, %c0_41] : memref<32x128xf32, #tpu.memory_space<vmem>>, vector<32x128xf32>
    %cst_42 = arith.constant dense<0.000000e+00> : vector<8x128xf32>
    %76 = tpu.matmul %68, %75, %cst_42 {dimension_numbers = #tpu.dot_dimension_numbers<[1], [0], [0], [1], [0, 0, 1, 1], [], []>} : vector<8x32xf32>, vector<32x128xf32>, vector<8x128xf32> -> vector<8x128xf32>
    %c0_43 = arith.constant 0 : index
    %c0_44 = arith.constant 0 : index
    %77 = vector.load %arg9[%c0_43, %c0_44] : memref<1x128xf32, #tpu.memory_space<vmem>>, vector<1x128xf32>
    %78 = vector.broadcast %77 : vector<1x128xf32> to vector<8x128xf32>
    %79 = arith.addf %76, %78 : vector<8x128xf32>
    %c0_45 = arith.constant 0 : index
    %c0_46 = arith.constant 0 : index
    %c0_47 = arith.constant 0 : index
    %80 = vector.load %arg10[%c0_45, %c0_46, %c0_47] : memref<1x8x128xf32, #tpu.memory_space<vmem>>, vector<1x8x128xf32>
    %81 = vector.shape_cast %80 : vector<1x8x128xf32> to vector<8x128xf32>
    %82 = vector.shape_cast %79 : vector<8x128xf32> to vector<1x8x128xf32>
    tpu.vector_store %arg10[%c0_45, %c0_46, %c0_47], %82 {strides = array<i32>} : memref<1x8x128xf32, #tpu.memory_space<vmem>>, vector<1x8x128xf32>,
    return
  }
  func.func @transform_0(%arg0: i32) -> (i32, i32, i32) {
    %c0_i32 = arith.constant 0 : i32
    %c0_i32_0 = arith.constant 0 : i32
    %c0_i32_1 = arith.constant 0 : i32
    return %arg0, %c0_i32, %c0_i32_0 : i32, i32, i32
  }
  func.func @transform_1(%arg0: i32) -> (i32, i32, i32) {
    %c0_i32 = arith.constant 0 : i32
    %c0_i32_0 = arith.constant 0 : i32
    %c0_i32_1 = arith.constant 0 : i32
    %c0_i32_2 = arith.constant 0 : i32
    return %c0_i32, %c0_i32_0, %c0_i32_1 : i32, i32, i32
  }
  func.func @transform_2(%arg0: i32) -> (i32, i32, i32) {
    %c0_i32 = arith.constant 0 : i32
    %c0_i32_0 = arith.constant 0 : i32
    %c0_i32_1 = arith.constant 0 : i32
    %c0_i32_2 = arith.constant 0 : i32
    return %c0_i32, %c0_i32_0, %c0_i32_1 : i32, i32, i32
  }
  func.func @transform_3(%arg0: i32) -> (i32, i32) {
    %c0_i32 = arith.constant 0 : i32
    %c0_i32_0 = arith.constant 0 : i32
    %c0_i32_1 = arith.constant 0 : i32
    return %c0_i32, %c0_i32_0 : i32, i32
  }
  func.func @transform_4(%arg0: i32) -> (i32, i32) {
    %c0_i32 = arith.constant 0 : i32
    %c0_i32_0 = arith.constant 0 : i32
    %c0_i32_1 = arith.constant 0 : i32
    return %c0_i32, %c0_i32_0 : i32, i32
  }
  func.func @transform_5(%arg0: i32) -> (i32, i32, i32) {
    %c0_i32 = arith.constant 0 : i32
    %c0_i32_0 = arith.constant 0 : i32
    %c0_i32_1 = arith.constant 0 : i32
    %c0_i32_2 = arith.constant 0 : i32
    return %c0_i32, %c0_i32_0, %c0_i32_1 : i32, i32, i32
  }
  func.func @transform_6(%arg0: i32) -> (i32, i32, i32) {
    %c0_i32 = arith.constant 0 : i32
    %c0_i32_0 = arith.constant 0 : i32
    %c0_i32_1 = arith.constant 0 : i32
    %c0_i32_2 = arith.constant 0 : i32
    return %c0_i32, %c0_i32_0, %c0_i32_1 : i32, i32, i32
  }
  func.func @transform_7(%arg0: i32) -> (i32, i32) {
    %c0_i32 = arith.constant 0 : i32
    %c0_i32_0 = arith.constant 0 : i32
    %c0_i32_1 = arith.constant 0 : i32
    return %c0_i32, %c0_i32_0 : i32, i32
  }
  func.func @transform_8(%arg0: i32) -> (i32, i32) {
    %c0_i32 = arith.constant 0 : i32
    %c0_i32_0 = arith.constant 0 : i32
    %c0_i32_1 = arith.constant 0 : i32
    return %c0_i32, %c0_i32_0 : i32, i32
  }
  func.func @transform_9(%arg0: i32) -> (i32, i32, i32) {
    %c0_i32 = arith.constant 0 : i32
    %c0_i32_0 = arith.constant 0 : i32
    %c0_i32_1 = arith.constant 0 : i32
    return %arg0, %c0_i32, %c0_i32_0 : i32, i32, i32
  }
  func.func @transform_10(%arg0: i32) -> (i32, i32, i32) {
    %c0_i32 = arith.constant 0 : i32
    %c0_i32_0 = arith.constant 0 : i32
    %c0_i32_1 = arith.constant 0 : i32
    %c0_i32_2 = arith.constant 0 : i32
    return %c0_i32, %c0_i32_0, %c0_i32_1 : i32, i32, i32
  }
  func.func @transform_11(%arg0: i32) -> (i32, i32, i32) {
    %c0_i32 = arith.constant 0 : i32
    %c0_i32_0 = arith.constant 0 : i32
    %c0_i32_1 = arith.constant 0 : i32
    %c0_i32_2 = arith.constant 0 : i32
    return %c0_i32, %c0_i32_0, %c0_i32_1 : i32, i32, i32
  }
}

</mosaic_0001>

<llo_original>
// kernel: decoder_generate.1
$region0: #{decoder_generate.1}
  #allocation0 [shape = 'u32[]', space=smem, size = 0x4, offset = 0x4, fixed_abs, tag = 'smem constant byte address 0x4 - core index']
  #allocation1 [shape = 'u32[144,128]{1,0:T(1,128)}', space=vmem, size = 0x12000, scoped, tag = 'internal scratch']
  %s0 = inlined_call_operand.vmem [shape: s32[8,8,1], index: 0, kind: input, shape index: {}]
  %s1 = inlined_call_operand.vmem [shape: f32[2,8,32], index: 1, kind: input, shape index: {}, may-alias: {1,10}]
  %s2 = inlined_call_operand.vmem [shape: f32[2,8,32], index: 2, kind: input, shape index: {}, may-alias: {2,11}]
  %s3 = inlined_call_operand.hbm [shape: f32[50,128], index: 3, kind: input, shape index: {}]
  %s4 = inlined_call_operand.hbm [shape: f32[32,128], index: 4, kind: input, shape index: {}]
  %s5 = inlined_call_operand.vmem [shape: f32[1,64,128], index: 5, kind: input, shape index: {}]
  %s6 = inlined_call_operand.vmem [shape: f32[1,1,128], index: 6, kind: input, shape index: {}]
  %s7 = inlined_call_operand.hbm [shape: f32[32,128], index: 7, kind: input, shape index: {}]
  %s8 = inlined_call_operand.vmem [shape: f32[1,128], index: 8, kind: input, shape index: {}]
  %s9 = inlined_call_operand.hbm [shape: f32[8,8,128], index: 9, kind: output, shape index: {0}]
  %s10 = inlined_call_operand.vmem [shape: f32[2,8,32], index: 10, kind: output, shape index: {1}, may-alias: {1,10}]
  %s11 = inlined_call_operand.vmem [shape: f32[2,8,32], index: 11, kind: output, shape index: {2}, may-alias: {2,11}]
  %12 = xla_tuple %s9, %s10, %s11
  %s13 = sld [smem:[#allocation0]]
  $region101: #{decoder_generate.1} parent=0
    _
  %s15 = ssub.s32 1, %s13
  %s16 = scalar_select 0, %s15, %s13
  $region1: #{decoder_generate.1} parent=0
    #allocation2 [shape = 'u8[28672]{0}', space=vmem, size = 0x7000, scoped, tag = 'input window, operand 3, single buffered']
    #allocation3 [shape = 's32[2]{0}', space=sflag, size = 0x8, scoped, tag = 'scoped memory for decoder_generate.1']
    #allocation4 [shape = 's32[2]{0}', space=sflag, size = 0x8, scoped, tag = 'scoped memory for decoder_generate.1']
    #allocation5 [shape = 'u8[16384]{0}', space=vmem, size = 0x4000, scoped, tag = 'input window, operand 4, single buffered']
    #allocation6 [shape = 's32[1]{0}', space=sflag, size = 0x4, scoped, tag = 'scoped memory for decoder_generate.1']
    #allocation7 [shape = 'u8[16384]{0}', space=vmem, size = 0x4000, scoped, tag = 'input window, operand 7, single buffered']
    #allocation8 [shape = 'u8[8192]{0}', space=vmem, size = 0x2000, scoped, tag = 'output window, operand 0']
    %17 = vsyncpa [#allocation3], 0
    %18 = vsyncpa [#allocation6], 0
    %19 = vsyncpa [#allocation4], 0
    %s20 = scalar_lea.sflag [#allocation4], 1
    %21 = vsyncpa %s20, 0
    loop: start=0, step=1, limit=10
    $region2: #{decoder_generate.1} parent=1 // loop_pre_header
      _
    $region3: #{decoder_generate.1} parent=1 // loop_header
      %s23 = sphi 0, %s27
      %p24 = scmp.ge.s32.totalorder %s23, 10
      %s33 = sphi 0, %s35
      %s36 = sphi 0, %s33
      %s37 = sphi 0, %s36
      %s53 = sphi 0, %s37
      %s57 = sphi 0, %s57
      %s59 = sphi 0, %s57
      %s60 = sphi 0, %s59
      %s74 = sphi 0, %s60
      %s78 = sphi 0, %s78
      %s80 = sphi 0, %s78
      %s81 = sphi 0, %s80
      %s95 = sphi 0, %s81
      %s99 = sphi 0, %s99
      %s101 = sphi 0, %s99
      %s102 = sphi 0, %s101
      %s116 = sphi 0, %s102
      %s120 = sphi 0, %s120
      %s122 = sphi 0, %s120
      %s123 = sphi 0, %s122
      %s137 = sphi 0, %s123
      %s141 = sphi 0, %s141
      %s143 = sphi 0, %s141
      %s144 = sphi 0, %s143
      %s158 = sphi 0, %s144
      %s162 = sphi 0, %s162
      %s164 = sphi 0, %s162
      %s165 = sphi 0, %s164
      %s179 = sphi 0, %s165
      %s183 = sphi 0, %s183
      %s185 = sphi 0, %s183
      %s186 = sphi 0, %s185
      %s200 = sphi 0, %s186
      %s204 = sphi 0, %s204
      %s206 = sphi 0, %s204
      %s207 = sphi 0, %s206
      %s221 = sphi 0, %s207
      %s227 = sphi 0, %s229
      %s230 = sphi 0, %s227
      %s231 = sphi 0, %s230
      %s247 = sphi 0, %s231
      %s251 = sphi 0, %s251
      %s253 = sphi 0, %s251
      %s254 = sphi 0, %s253
      %s268 = sphi 0, %s254
      %s272 = sphi 0, %s272
      %s274 = sphi 0, %s272
      %s275 = sphi 0, %s274
      %s289 = sphi 0, %s275
    $region4: #{decoder_generate.1} parent=1 // loop_header_branch
      %26 = sbr.rel (%p24) target = $region8
    $region5: #{decoder_generate.1} parent=1 // loop_body
      %s28 = ssub.s32 %s23, 1
      %s29 = ssub.s32 %s23, 2
      %s30 = sadd.s32 %s23, 1
      %s31 = ssub.s32 %s23, %s30
      %p32 = scmp.eq.s32.totalorder %s31, 0
      %s34 = sadd.s32 %s33, 1
      %s35 = scalar_select %p32, %s33, %s34
      %p38 = pneg %p32
      %p39 = scmp.eq.s32.totalorder %s23, 7
      %p40 = por %p38, %p39
      %p41 = scmp.ne.s32.totalorder %s33, %s36
      %p42 = scmp.eq.s32.totalorder %s23, 0
      %p43 = por %p41, %p42
      %p44 = scmp.ne.s32.totalorder %s33, %s36
      %p45 = scmp.eq.s32.totalorder %s28, 7
      %p46 = por %p44, %p45
      %p47 = scmp.ne.s32.totalorder %s36, %s37
      %p48 = scmp.eq.s32.totalorder %s28, 0
      %p49 = por %p47, %p48
      %p50 = scmp.ne.s32.totalorder %s36, %s37
      %p51 = scmp.eq.s32.totalorder %s29, 7
      %p52 = por %p50, %p51
      %p54 = scmp.ne.s32.totalorder %s37, %s53
      %p55 = scmp.eq.s32.totalorder %s29, 0
      %p56 = por %p54, %p55
      %s58 = sadd.s32 %s57, 1
      %p61 = scmp.eq.s32.totalorder %s23, 7
      %p62 = scmp.ne.s32.totalorder %s57, %s59
      %p63 = scmp.eq.s32.totalorder %s23, 0
      %p64 = por %p62, %p63
      %p65 = scmp.ne.s32.totalorder %s57, %s59
      %p66 = scmp.eq.s32.totalorder %s28, 7
      %p67 = por %p65, %p66
      %p68 = scmp.ne.s32.totalorder %s59, %s60
      %p69 = scmp.eq.s32.totalorder %s28, 0
      %p70 = por %p68, %p69
      %p71 = scmp.ne.s32.totalorder %s59, %s60
      %p72 = scmp.eq.s32.totalorder %s29, 7
      %p73 = por %p71, %p72
      %p75 = scmp.ne.s32.totalorder %s60, %s74
      %p76 = scmp.eq.s32.totalorder %s29, 0
      %p77 = por %p75, %p76
      %s79 = sadd.s32 %s78, 1
      %p82 = scmp.eq.s32.totalorder %s23, 7
      %p83 = scmp.ne.s32.totalorder %s78, %s80
      %p84 = scmp.eq.s32.totalorder %s23, 0
      %p85 = por %p83, %p84
      %p86 = scmp.ne.s32.totalorder %s78, %s80
      %p87 = scmp.eq.s32.totalorder %s28, 7
      %p88 = por %p86, %p87
      %p89 = scmp.ne.s32.totalorder %s80, %s81
      %p90 = scmp.eq.s32.totalorder %s28, 0
      %p91 = por %p89, %p90
      %p92 = scmp.ne.s32.totalorder %s80, %s81
      %p93 = scmp.eq.s32.totalorder %s29, 7
      %p94 = por %p92, %p93
      %p96 = scmp.ne.s32.totalorder %s81, %s95
      %p97 = scmp.eq.s32.totalorder %s29, 0
      %p98 = por %p96, %p97
      %s100 = sadd.s32 %s99, 1
      %p103 = scmp.eq.s32.totalorder %s23, 7
      %p104 = scmp.ne.s32.totalorder %s99, %s101
      %p105 = scmp.eq.s32.totalorder %s23, 0
      %p106 = por %p104, %p105
      %p107 = scmp.ne.s32.totalorder %s99, %s101
      %p108 = scmp.eq.s32.totalorder %s28, 7
      %p109 = por %p107, %p108
      %p110 = scmp.ne.s32.totalorder %s101, %s102
      %p111 = scmp.eq.s32.totalorder %s28, 0
      %p112 = por %p110, %p111
      %p113 = scmp.ne.s32.totalorder %s101, %s102
      %p114 = scmp.eq.s32.totalorder %s29, 7
      %p115 = por %p113, %p114
      %p117 = scmp.ne.s32.totalorder %s102, %s116
      %p118 = scmp.eq.s32.totalorder %s29, 0
      %p119 = por %p117, %p118
      %s121 = sadd.s32 %s120, 1
      %p124 = scmp.eq.s32.totalorder %s23, 7
      %p125 = scmp.ne.s32.totalorder %s120, %s122
      %p126 = scmp.eq.s32.totalorder %s23, 0
      %p127 = por %p125, %p126
      %p128 = scmp.ne.s32.totalorder %s120, %s122
      %p129 = scmp.eq.s32.totalorder %s28, 7
      %p130 = por %p128, %p129
      %p131 = scmp.ne.s32.totalorder %s122, %s123
      %p132 = scmp.eq.s32.totalorder %s28, 0
      %p133 = por %p131, %p132
      %p134 = scmp.ne.s32.totalorder %s122, %s123
      %p135 = scmp.eq.s32.totalorder %s29, 7
      %p136 = por %p134, %p135
      %p138 = scmp.ne.s32.totalorder %s123, %s137
      %p139 = scmp.eq.s32.totalorder %s29, 0
      %p140 = por %p138, %p139
      %s142 = sadd.s32 %s141, 1
      %p145 = scmp.eq.s32.totalorder %s23, 7
      %p146 = scmp.ne.s32.totalorder %s141, %s143
      %p147 = scmp.eq.s32.totalorder %s23, 0
      %p148 = por %p146, %p147
      %p149 = scmp.ne.s32.totalorder %s141, %s143
      %p150 = scmp.eq.s32.totalorder %s28, 7
      %p151 = por %p149, %p150
      %p152 = scmp.ne.s32.totalorder %s143, %s144
      %p153 = scmp.eq.s32.totalorder %s28, 0
      %p154 = por %p152, %p153
      %p155 = scmp.ne.s32.totalorder %s143, %s144
      %p156 = scmp.eq.s32.totalorder %s29, 7
      %p157 = por %p155, %p156
      %p159 = scmp.ne.s32.totalorder %s144, %s158
      %p160 = scmp.eq.s32.totalorder %s29, 0
      %p161 = por %p159, %p160
      %s163 = sadd.s32 %s162, 1
      %p166 = scmp.eq.s32.totalorder %s23, 7
      %p167 = scmp.ne.s32.totalorder %s162, %s164
      %p168 = scmp.eq.s32.totalorder %s23, 0
      %p169 = por %p167, %p168
      %p170 = scmp.ne.s32.totalorder %s162, %s164
      %p171 = scmp.eq.s32.totalorder %s28, 7
      %p172 = por %p170, %p171
      %p173 = scmp.ne.s32.totalorder %s164, %s165
      %p174 = scmp.eq.s32.totalorder %s28, 0
      %p175 = por %p173, %p174
      %p176 = scmp.ne.s32.totalorder %s164, %s165
      %p177 = scmp.eq.s32.totalorder %s29, 7
      %p178 = por %p176, %p177
      %p180 = scmp.ne.s32.totalorder %s165, %s179
      %p181 = scmp.eq.s32.totalorder %s29, 0
      %p182 = por %p180, %p181
      %s184 = sadd.s32 %s183, 1
      %p187 = scmp.eq.s32.totalorder %s23, 7
      %p188 = scmp.ne.s32.totalorder %s183, %s185
      %p189 = scmp.eq.s32.totalorder %s23, 0
      %p190 = por %p188, %p189
      %p191 = scmp.ne.s32.totalorder %s183, %s185
      %p192 = scmp.eq.s32.totalorder %s28, 7
      %p193 = por %p191, %p192
      %p194 = scmp.ne.s32.totalorder %s185, %s186
      %p195 = scmp.eq.s32.totalorder %s28, 0
      %p196 = por %p194, %p195
      %p197 = scmp.ne.s32.totalorder %s185, %s186
      %p198 = scmp.eq.s32.totalorder %s29, 7
      %p199 = por %p197, %p198
      %p201 = scmp.ne.s32.totalorder %s186, %s200
      %p202 = scmp.eq.s32.totalorder %s29, 0
      %p203 = por %p201, %p202
      %s205 = sadd.s32 %s204, 1
      %p208 = scmp.eq.s32.totalorder %s23, 7
      %p209 = scmp.ne.s32.totalorder %s204, %s206
      %p210 = scmp.eq.s32.totalorder %s23, 0
      %p211 = por %p209, %p210
      %p212 = scmp.ne.s32.totalorder %s204, %s206
      %p213 = scmp.eq.s32.totalorder %s28, 7
      %p214 = por %p212, %p213
      %p215 = scmp.ne.s32.totalorder %s206, %s207
      %p216 = scmp.eq.s32.totalorder %s28, 0
      %p217 = por %p215, %p216
      %p218 = scmp.ne.s32.totalorder %s206, %s207
      %p219 = scmp.eq.s32.totalorder %s29, 7
      %p220 = por %p218, %p219
      %p222 = scmp.ne.s32.totalorder %s207, %s221
      %p223 = scmp.eq.s32.totalorder %s29, 0
      %p224 = por %p222, %p223
      %s225 = ssub.s32 %s23, %s30
      %p226 = scmp.eq.s32.totalorder %s225, 0
      %s228 = sadd.s32 %s227, 1
      %s229 = scalar_select %p226, %s227, %s228
      %p232 = pneg %p226
      %p233 = scmp.eq.s32.totalorder %s23, 7
      %p234 = por %p232, %p233
      %p235 = scmp.ne.s32.totalorder %s227, %s230
      %p236 = scmp.eq.s32.totalorder %s23, 0
      %p237 = por %p235, %p236
      %p238 = scmp.ne.s32.totalorder %s227, %s230
      %p239 = scmp.eq.s32.totalorder %s28, 7
      %p240 = por %p238, %p239
      %p241 = scmp.ne.s32.totalorder %s230, %s231
      %p242 = scmp.eq.s32.totalorder %s28, 0
      %p243 = por %p241, %p242
      %p244 = scmp.ne.s32.totalorder %s230, %s231
      %p245 = scmp.eq.s32.totalorder %s29, 7
      %p246 = por %p244, %p245
      %p248 = scmp.ne.s32.totalorder %s231, %s247
      %p249 = scmp.eq.s32.totalorder %s29, 0
      %p250 = por %p248, %p249
      %s252 = sadd.s32 %s251, 1
      %p255 = scmp.eq.s32.totalorder %s23, 7
      %p256 = scmp.ne.s32.totalorder %s251, %s253
      %p257 = scmp.eq.s32.totalorder %s23, 0
      %p258 = por %p256, %p257
      %p259 = scmp.ne.s32.totalorder %s251, %s253
      %p260 = scmp.eq.s32.totalorder %s28, 7
      %p261 = por %p259, %p260
      %p262 = scmp.ne.s32.totalorder %s253, %s254
      %p263 = scmp.eq.s32.totalorder %s28, 0
      %p264 = por %p262, %p263
      %p265 = scmp.ne.s32.totalorder %s253, %s254
      %p266 = scmp.eq.s32.totalorder %s29, 7
      %p267 = por %p265, %p266
      %p269 = scmp.ne.s32.totalorder %s254, %s268
      %p270 = scmp.eq.s32.totalorder %s29, 0
      %p271 = por %p269, %p270
      %s273 = sadd.s32 %s272, 1
      %p276 = scmp.eq.s32.totalorder %s23, 7
      %p277 = scmp.ne.s32.totalorder %s272, %s274
      %p278 = scmp.eq.s32.totalorder %s23, 0
      %p279 = por %p277, %p278
      %p280 = scmp.ne.s32.totalorder %s272, %s274
      %p281 = scmp.eq.s32.totalorder %s28, 7
      %p282 = por %p280, %p281
      %p283 = scmp.ne.s32.totalorder %s274, %s275
      %p284 = scmp.eq.s32.totalorder %s28, 0
      %p285 = por %p283, %p284
      %p286 = scmp.ne.s32.totalorder %s274, %s275
      %p287 = scmp.eq.s32.totalorder %s29, 7
      %p288 = por %p286, %p287
      %p290 = scmp.ne.s32.totalorder %s275, %s289
      %p291 = scmp.eq.s32.totalorder %s29, 0
      %p292 = por %p290, %p291
      %p293 = scmp.le.s32.totalorder 1, %s23
      %p294 = scmp.lt.s32.totalorder %s23, 9
      %p295 = pnand %p293, %p294
      %p296 = pneg %p295
      // Predicated region
      $region9: #{decoder_generate.1} parent=5 // pred_check
        _
      $region10: #{decoder_generate.1} parent=5 // pred_check_branch
        %298 = sbr.rel (%p295) target = $region12
      $region11: #{decoder_generate.1} parent=5 // pred_region
        %s299 = ssub.s32 %s23, 1
        // Predicated region
        $region13: #{decoder_generate.1} parent=11 // pred_check
          %p300 = pneg %p70
        $region14: #{decoder_generate.1} parent=11 // pred_check_branch
          %302 = sbr.rel (%p300) target = $region16
        $region15: #{decoder_generate.1} parent=11 // pred_region
          _
        $region16: #{decoder_generate.1} parent=11 // pred_fallthru
          _
        // Predicated region
        $region17: #{decoder_generate.1} parent=11 // pred_check
          %p303 = pneg %p91
        $region18: #{decoder_generate.1} parent=11 // pred_check_branch
          %305 = sbr.rel (%p303) target = $region20
        $region19: #{decoder_generate.1} parent=11 // pred_region
          _
        $region20: #{decoder_generate.1} parent=11 // pred_fallthru
          _
        // Predicated region
        $region21: #{decoder_generate.1} parent=11 // pred_check
          %p306 = pneg %p112
        $region22: #{decoder_generate.1} parent=11 // pred_check_branch
          %308 = sbr.rel (%p306) target = $region24
        $region23: #{decoder_generate.1} parent=11 // pred_region
          %s310 = ssub.s32 896, 896
          %311 = vsyncadd [#allocation3], %s310
          %s312 = sshll.u32 [#allocation2], 4
          %s313 = int_to_ptr.vmem [resolvable:$true] %s312
          %318 = dma.hbm_to_vmem [thread:$0]  %s3, 896, %s313, [#allocation3], 128, 128, 8
        $region24: #{decoder_generate.1} parent=11 // pred_fallthru
          _
        // Predicated region
        $region25: #{decoder_generate.1} parent=11 // pred_check
          %p319 = pneg %p133
        $region26: #{decoder_generate.1} parent=11 // pred_check_branch
          %321 = sbr.rel (%p319) target = $region28
        $region27: #{decoder_generate.1} parent=11 // pred_region
          %s323 = ssub.s32 512, 512
          %324 = vsyncadd [#allocation6], %s323
          %s325 = sshll.u32 [#allocation5], 4
          %s326 = int_to_ptr.vmem [resolvable:$true] %s325
          %331 = dma.hbm_to_vmem [thread:$0]  %s4, 512, %s326, [#allocation6], 128, 128, 8
        $region28: #{decoder_generate.1} parent=11 // pred_fallthru
          _
        // Predicated region
        $region29: #{decoder_generate.1} parent=11 // pred_check
          %p332 = pneg %p154
        $region30: #{decoder_generate.1} parent=11 // pred_check_branch
          %334 = sbr.rel (%p332) target = $region32
        $region31: #{decoder_generate.1} parent=11 // pred_region
          _
        $region32: #{decoder_generate.1} parent=11 // pred_fallthru
          _
        // Predicated region
        $region33: #{decoder_generate.1} parent=11 // pred_check
          %p335 = pneg %p175
        $region34: #{decoder_generate.1} parent=11 // pred_check_branch
          %337 = sbr.rel (%p335) target = $region36
        $region35: #{decoder_generate.1} parent=11 // pred_region
          _
        $region36: #{decoder_generate.1} parent=11 // pred_fallthru
          _
        // Predicated region
        $region37: #{decoder_generate.1} parent=11 // pred_check
          %p338 = pneg %p196
        $region38: #{decoder_generate.1} parent=11 // pred_check_branch
          %340 = sbr.rel (%p338) target = $region40
        $region39: #{decoder_generate.1} parent=11 // pred_region
          %s342 = ssub.s32 512, 512
          %343 = vsyncadd [#allocation6], %s342
          %s344 = sshll.u32 [#allocation7], 4
          %s345 = int_to_ptr.vmem [resolvable:$true] %s344
          %350 = dma.hbm_to_vmem [thread:$0]  %s7, 512, %s345, [#allocation6], 128, 128, 8
        $region40: #{decoder_generate.1} parent=11 // pred_fallthru
          _
        // Predicated region
        $region41: #{decoder_generate.1} parent=11 // pred_check
          %p351 = pneg %p217
        $region42: #{decoder_generate.1} parent=11 // pred_check_branch
          %353 = sbr.rel (%p351) target = $region44
        $region43: #{decoder_generate.1} parent=11 // pred_region
          _
        $region44: #{decoder_generate.1} parent=11 // pred_fallthru
          _
      $region12: #{decoder_generate.1} parent=5 // pred_fallthru
        _
      %p354 = scmp.lt.s32.totalorder %s23, 8
      // Predicated region
      $region45: #{decoder_generate.1} parent=5 // pred_check
        %p355 = pneg %p354
      $region46: #{decoder_generate.1} parent=5 // pred_check_branch
        %357 = sbr.rel (%p355) target = $region48
      $region47: #{decoder_generate.1} parent=5 // pred_region
        // Predicated region
        $region49: #{decoder_generate.1} parent=47 // pred_check
          %p358 = pneg %p43
        $region50: #{decoder_generate.1} parent=47 // pred_check_branch
          %360 = sbr.rel (%p358) target = $region52
        $region51: #{decoder_generate.1} parent=47 // pred_region
          %p361 = scmp.lt.s32.totalorder %s23, 7
          %s362 = scalar_select %p361, %s23, 7
          %s363 = smul.addr %s362, 8
          %s364 = scalar_lea.vmem %s0, %s363
        $region52: #{decoder_generate.1} parent=47 // pred_fallthru
          _
      $region48: #{decoder_generate.1} parent=5 // pred_fallthru
        _
      %p365 = scmp.le.s32.totalorder 1, %s23
      %p366 = scmp.lt.s32.totalorder %s23, 9
      %p367 = pnand %p365, %p366
      %p368 = pneg %p367
      // Predicated region
      $region53: #{decoder_generate.1} parent=5 // pred_check
        _
      $region54: #{decoder_generate.1} parent=5 // pred_check_branch
        %370 = sbr.rel (%p367) target = $region56
      $region55: #{decoder_generate.1} parent=5 // pred_region
        %s371 = ssub.s32 %s23, 1
        // Predicated region
        $region57: #{decoder_generate.1} parent=55 // pred_check
          %p372 = pneg %p112
        $region58: #{decoder_generate.1} parent=55 // pred_check_branch
          %374 = sbr.rel (%p372) target = $region60
        $region59: #{decoder_generate.1} parent=55 // pred_region
          %375 = dma.done [#allocation3], 896
        $region60: #{decoder_generate.1} parent=55 // pred_fallthru
          _
        // Predicated region
        $region61: #{decoder_generate.1} parent=55 // pred_check
          %p376 = pneg %p133
        $region62: #{decoder_generate.1} parent=55 // pred_check_branch
          %378 = sbr.rel (%p376) target = $region64
        $region63: #{decoder_generate.1} parent=55 // pred_region
          %379 = dma.done [#allocation6], 512
        $region64: #{decoder_generate.1} parent=55 // pred_fallthru
          _
        // Predicated region
        $region65: #{decoder_generate.1} parent=55 // pred_check
          %p380 = pneg %p196
        $region66: #{decoder_generate.1} parent=55 // pred_check_branch
          %382 = sbr.rel (%p380) target = $region68
        $region67: #{decoder_generate.1} parent=55 // pred_region
          %383 = dma.done [#allocation6], 512
        $region68: #{decoder_generate.1} parent=55 // pred_fallthru
          _
        %p384 = scmp.lt.s32.totalorder %s28, 7
        %s385 = scalar_select %p384, %s28, 7
        %s386 = smul.addr %s385, 8
        %s387 = scalar_lea.vmem %s0, %s386
        %p388 = pneg %p49
        %p389 = pneg %p46
        %p390 = pneg %p70
        %p391 = pneg %p67
        %p392 = pneg %p91
        %p393 = pneg %p88
        %p394 = pneg %p112
        %p395 = pneg %p109
        %p396 = pneg %p133
        %p397 = pneg %p130
        %p398 = pneg %p154
        %p399 = pneg %p151
        %p400 = pneg %p175
        %p401 = pneg %p172
        %p402 = pneg %p196
        %p403 = pneg %p193
        %p404 = pneg %p217
        %p405 = pneg %p214
        %p406 = pneg %p243
        %p407 = pneg %p240
        %s408 = sand.u32 %s230, 1
        %s409 = scalar_lea.sflag [#allocation4], %s408
        %s410 = sand.u32 %s230, 1
        %s411 = smul.addr %s410, 8
        %s412 = scalar_lea.vmem [#allocation8], %s411
        %p413 = pneg %p264
        %p414 = pneg %p261
        %p415 = pneg %p285
        %p416 = pneg %p282
        %p417 = scmp.lt.s32.totalorder %s28, 7
        %s418 = scalar_select %p417, %s28, 7
        %s419 = smul.addr %s418, 8
        %s420 = scalar_lea.vmem %s0, %s419
        %p421 = scmp.eq.s32.totalorder %s28, 0
        // Predicated region
        $region69: #{decoder_generate.1} parent=55 // pred_check
          %p422 = pneg %p421
        $region70: #{decoder_generate.1} parent=55 // pred_check_branch
          %424 = sbr.rel (%p422) target = $region72
        $region71: #{decoder_generate.1} parent=55 // pred_region
          %v425 = vld [vmem:[%s1] sm:$0xff]
          %v426 = vld [vmem:[%s1 + $0x8] sm:$0xff]
          %vm427 = vcmask 261120
          %428 = vst.msk [vmem:[%s10] sm:$0xff] %vm427, %v425
          %429 = vst.msk [vmem:[%s10 + $0x8] sm:$0xff] %vm427, %v426
          %v430 = vld [vmem:[%s2] sm:$0xff]
          %v431 = vld [vmem:[%s2 + $0x8] sm:$0xff]
          %432 = vst.msk [vmem:[%s11] sm:$0xff] %vm427, %v430
          %433 = vst.msk [vmem:[%s11 + $0x8] sm:$0xff] %vm427, %v431
        $region72: #{decoder_generate.1} parent=55 // pred_fallthru
          _
        %v434 = vld [vmem:[%s420] sm:$0xff]
        %v435 = vlaneseq
        %v436 = vand.u32 %v435, 127
        %437 = vset.pattern.permute.xlu0 0
        %438 = vperm.xlu0 %437, %v434
        %v439 = vpop.permute.xlu0 %438
        %vm440 = vcmp.eq.s32.totalorder %v436, %v439
        %v441 = vsel %vm440, 1, 0
        %v442 = vcvt.s32.f32 %v441
        %v443 = vld [vmem:[#allocation2] sm:$0xff]
        %v444 = vld [vmem:[#allocation2 + $0x8] sm:$0xff]
        %v445 = vld [vmem:[#allocation2 + $0x10] sm:$0xff]
        %v446 = vld [vmem:[#allocation2 + $0x18] sm:$0xff]
        %v447 = vld [vmem:[#allocation2 + $0x20] sm:$0xff]
        %v448 = vld [vmem:[#allocation2 + $0x28] sm:$0xff]
        %v449 = vld [vmem:[#allocation2 + $0x30] sm:$0x3]
        %v450 = vld [vmem:[%s10] sm:$0xff]
        %v451 = vld [vmem:[#allocation5] sm:$0xff]
        %v452 = vld [vmem:[#allocation5 + $0x8] sm:$0xff]
        %v453 = vld [vmem:[#allocation5 + $0x10] sm:$0xff]
        %v454 = vld [vmem:[#allocation5 + $0x18] sm:$0xff]
        %vm455 = vcmask 261120
        %v457 = vsel %vm455, %v450, 0
        %459 = vmatprep.subr.mxu0 0.0
        %460 = vmatpush1.msra.mxu0 %v451
        %461 = vmatprep.subr.mxu0 0.0
        %462 = vmatpush1.msra.mxu0 %v452
        %463 = vmatprep.subr.mxu0 0.0
        %464 = vmatpush1.msra.mxu0 %v453
        %465 = vmatprep.subr.mxu0 0.0
        %466 = vmatpush1.msra.mxu0 %v454
        %467 = vmatprep.subr.mxu0 0.0
        %468 = vmatpush1.msra.mxu0 0.0
        %469 = vmatprep.subr.mxu0 0.0
        %470 = vmatpush1.msra.mxu0 0.0
        %471 = vmatprep.subr.mxu0 0.0
        %472 = vmatpush1.msra.mxu0 0.0
        %473 = vmatprep.subr.mxu0 0.0
        %474 = vmatpush1.msra.mxu0 0.0
        %475 = vmatprep.subr.mxu0 0.0
        %476 = vmatpush1.msra.mxu0 0.0
        %477 = vmatprep.subr.mxu0 0.0
        %478 = vmatpush1.msra.mxu0 0.0
        %479 = vmatprep.subr.mxu0 0.0
        %480 = vmatpush1.msra.mxu0 0.0
        %481 = vmatprep.subr.mxu0 0.0
        %482 = vmatpush1.msra.mxu0 0.0
        %483 = vmatprep.subr.mxu0 0.0
        %484 = vmatpush1.msra.mxu0 0.0
        %485 = vmatprep.subr.mxu0 0.0
        %486 = vmatpush1.msra.mxu0 0.0
        %487 = vmatprep.subr.mxu0 0.0
        %488 = vmatpush1.msra.mxu0 0.0
        %489 = vmatprep.subr.mxu0 0.0
        %490 = vmatpush1.msra.mxu0 0.0
        %491 = vmatprep.subr.mxu0 0.0
        %492 = vmatpush1.msra.mxu0 0.0
        %493 = vmatprep.subr.mxu0 0.0
        %494 = vmatpush1.msra.mxu0 0.0
        %495 = vmatprep.subr.mxu0 0.0
        %496 = vmatpush1.msra.mxu0 0.0
        %497 = vmatprep.subr.mxu0 0.0
        %498 = vmatpush1.msra.mxu0 0.0
        %499 = vmatprep.subr.mxu0 0.0
        %500 = vmatpush1.msra.mxu0 0.0
        %501 = vmatprep.subr.mxu0 0.0
        %502 = vmatpush1.msra.mxu0 0.0
        %503 = vmatprep.subr.mxu0 0.0
        %504 = vmatpush1.msra.mxu0 0.0
        %505 = vmatprep.subr.mxu0 0.0
        %506 = vmatpush1.msra.mxu0 0.0
        %507 = vmatprep.subr.mxu0 0.0
        %508 = vmatpush1.msra.mxu0 0.0
        %509 = vmatprep.subr.mxu0 0.0
        %510 = vmatpush1.msra.mxu0 0.0
        %511 = vmatprep.subr.mxu0 0.0
        %512 = vmatpush1.msra.mxu0 0.0
        %513 = vmatprep.subr.mxu0 0.0
        %514 = vmatpush1.msra.mxu0 0.0
        %515 = vmatprep.subr.mxu0 0.0
        %516 = vmatpush1.msra.mxu0 0.0
        %517 = vmatprep.subr.mxu0 0.0
        %518 = vmatpush1.msra.mxu0 0.0
        %519 = vmatprep.subr.mxu0 0.0
        %520 = vmatpush1.msra.mxu0 0.0
        %521 = vmatprep.subr.mxu0 0.0
        %522 = vmatpush1.msra.mxu0 0.0
        %523 = vmatprep.mubr.f32.mxu0 0.0
        %524 = vmatmul.mubr.f32.gmra.mrb[0].mxu0 %v457
        %v525 = vpop.f32.mrb[0].mxu0
        %v526 = vadd.f32 0.0, %v525
        %v527 = vpop.f32.mrb[0].mxu0
        %528 = vdwg.mxu0
        %vm529 = vcmask 408576
        %v531 = vsel %vm529, %v442, 0
        %vm533 = vcmask 1041408
        %v535 = vsel %vm533, %v449, 0
        %537 = vmatprep.subr.mxu0 0.0
        %538 = vmatpush1.msra.mxu0 %v443
        %539 = vmatprep.subr.mxu0 0.0
        %540 = vmatpush1.msra.mxu0 %v444
        %541 = vmatprep.subr.mxu0 0.0
        %542 = vmatpush1.msra.mxu0 %v445
        %543 = vmatprep.subr.mxu0 0.0
        %544 = vmatpush1.msra.mxu0 %v446
        %545 = vmatprep.subr.mxu0 0.0
        %546 = vmatpush1.msra.mxu0 %v447
        %547 = vmatprep.subr.mxu0 0.0
        %548 = vmatpush1.msra.mxu0 %v448
        %549 = vmatprep.subr.mxu0 0.0
        %550 = vmatpush1.msra.mxu0 %v535
        %551 = vmatprep.subr.mxu0 0.0
        %552 = vmatpush1.msra.mxu0 0.0
        %553 = vmatprep.subr.mxu0 0.0
        %554 = vmatpush1.msra.mxu0 0.0
        %555 = vmatprep.subr.mxu0 0.0
        %556 = vmatpush1.msra.mxu0 0.0
        %557 = vmatprep.subr.mxu0 0.0
        %558 = vmatpush1.msra.mxu0 0.0
        %559 = vmatprep.subr.mxu0 0.0
        %560 = vmatpush1.msra.mxu0 0.0
        %561 = vmatprep.subr.mxu0 0.0
        %562 = vmatpush1.msra.mxu0 0.0
        %563 = vmatprep.subr.mxu0 0.0
        %564 = vmatpush1.msra.mxu0 0.0
        %565 = vmatprep.subr.mxu0 0.0
        %566 = vmatpush1.msra.mxu0 0.0
        %567 = vmatprep.subr.mxu0 0.0
        %568 = vmatpush1.msra.mxu0 0.0
        %569 = vmatprep.subr.mxu0 0.0
        %570 = vmatpush1.msra.mxu0 0.0
        %571 = vmatprep.subr.mxu0 0.0
        %572 = vmatpush1.msra.mxu0 0.0
        %573 = vmatprep.subr.mxu0 0.0
        %574 = vmatpush1.msra.mxu0 0.0
        %575 = vmatprep.subr.mxu0 0.0
        %576 = vmatpush1.msra.mxu0 0.0
        %577 = vmatprep.subr.mxu0 0.0
        %578 = vmatpush1.msra.mxu0 0.0
        %579 = vmatprep.subr.mxu0 0.0
        %580 = vmatpush1.msra.mxu0 0.0
        %581 = vmatprep.subr.mxu0 0.0
        %582 = vmatpush1.msra.mxu0 0.0
        %583 = vmatprep.subr.mxu0 0.0
        %584 = vmatpush1.msra.mxu0 0.0
        %585 = vmatprep.subr.mxu0 0.0
        %586 = vmatpush1.msra.mxu0 0.0
        %587 = vmatprep.subr.mxu0 0.0
        %588 = vmatpush1.msra.mxu0 0.0
        %589 = vmatprep.subr.mxu0 0.0
        %590 = vmatpush1.msra.mxu0 0.0
        %591 = vmatprep.subr.mxu0 0.0
        %592 = vmatpush1.msra.mxu0 0.0
        %593 = vmatprep.subr.mxu0 0.0
        %594 = vmatpush1.msra.mxu0 0.0
        %595 = vmatprep.subr.mxu0 0.0
        %596 = vmatpush1.msra.mxu0 0.0
        %597 = vmatprep.subr.mxu0 0.0
        %598 = vmatpush1.msra.mxu0 0.0
        %599 = vmatprep.subr.mxu0 0.0
        %600 = vmatpush1.msra.mxu0 0.0
        %601 = vmatprep.mubr.f32.mxu0 0.0
        %602 = vmatmul.mubr.f32.gmra.mrb[0].mxu0 %v531
        %v603 = vpop.f32.mrb[0].mxu0
        %v604 = vadd.f32 %v526, %v603
        %v605 = vpop.f32.mrb[0].mxu0
        %606 = vdwg.mxu0
        %v607 = vld [vmem:[%s11] sm:$0xff]
        %v608 = vxor.u32 %v604, 2147483648
        %v609 = vmul.f32 %v608, 1.442695
        %v610 = vpow.pop %v609
        %v611 = vadd.f32 %v610, 1.0
        %v612 = vrcp.pop %v611
        %v613 = vmul.f32 1.0, %v612
        %v614 = vtanh.pop %v604
        %616 = vrot.lane.b32.xlu0 %v607, 32
        %v617 = vpop.permute.xlu0 %616
        %v619 = vmul.f32 %v613, %v617
        %621 = vrot.lane.b32.xlu0 %v614, 32
        %v622 = vpop.permute.xlu0 %621
        %v624 = vmul.f32 %v613, %v622
        %626 = vrot.lane.b32.xlu0 %v624, 32
        %v627 = vpop.permute.xlu0 %626
        %v629 = vadd.f32 %v619, %v627
        %v630 = vtanh.pop %v629
        %632 = vrot.lane.b32.xlu0 %v630, 32
        %v633 = vpop.permute.xlu0 %632
        %v635 = vmul.f32 %v613, %v633
        %637 = vrot.lane.b32.xlu0 %v635, 64
        %v638 = vpop.permute.xlu0 %637
        %640 = vst.msk [vmem:[%s10] sm:$0xff] %vm455, %v638
        %642 = vrot.lane.b32.xlu0 %v629, 96
        %v643 = vpop.permute.xlu0 %642
        %645 = vst.msk [vmem:[%s11] sm:$0xff] %vm455, %v643
        %s646 = scalar_lea.vmem %s10, 8
        %v647 = vld [vmem:[%s646] sm:$0xff]
        %649 = vrot.lane.b32.xlu0 %v647, 32
        %v650 = vpop.permute.xlu0 %649
        %v652 = vsel %vm455, %v638, %v650
        %v653 = vld [vmem:[%s5] sm:$0xff]
        %v654 = vld [vmem:[%s5 + $0x8] sm:$0xff]
        %v655 = vld [vmem:[%s5 + $0x10] sm:$0xff]
        %v656 = vld [vmem:[%s5 + $0x18] sm:$0xff]
        %v657 = vld [vmem:[%s5 + $0x20] sm:$0xff]
        %v658 = vld [vmem:[%s5 + $0x28] sm:$0xff]
        %v659 = vld [vmem:[%s5 + $0x30] sm:$0xff]
        %v660 = vld [vmem:[%s5 + $0x38] sm:$0xff]
        %v661 = vld [vmem:[%s6] sm:$0x1]
        %v663 = vlaneseq
        %v664 = vshrl.u32 %v663, 7
        %v665 = vsub.s32 0, %v664
        %v666 = vrot.slane %v661, %v665
        %vm668 = vcmask 523264
        %v670 = vsel %vm668, %v652, 0
        %672 = vmatprep.subr.mxu0 0.0
        %673 = vmatpush1.msra.mxu0 %v653
        %674 = vmatprep.subr.mxu0 0.0
        %675 = vmatpush1.msra.mxu0 %v654
        %676 = vmatprep.subr.mxu0 0.0
        %677 = vmatpush1.msra.mxu0 %v655
        %678 = vmatprep.subr.mxu0 0.0
        %679 = vmatpush1.msra.mxu0 %v656
        %680 = vmatprep.subr.mxu0 0.0
        %681 = vmatpush1.msra.mxu0 %v657
        %682 = vmatprep.subr.mxu0 0.0
        %683 = vmatpush1.msra.mxu0 %v658
        %684 = vmatprep.subr.mxu0 0.0
        %685 = vmatpush1.msra.mxu0 %v659
        %686 = vmatprep.subr.mxu0 0.0
        %687 = vmatpush1.msra.mxu0 %v660
        %688 = vmatprep.subr.mxu0 0.0
        %689 = vmatpush1.msra.mxu0 0.0
        %690 = vmatprep.subr.mxu0 0.0
        %691 = vmatpush1.msra.mxu0 0.0
        %692 = vmatprep.subr.mxu0 0.0
        %693 = vmatpush1.msra.mxu0 0.0
        %694 = vmatprep.subr.mxu0 0.0
        %695 = vmatpush1.msra.mxu0 0.0
        %696 = vmatprep.subr.mxu0 0.0
        %697 = vmatpush1.msra.mxu0 0.0
        %698 = vmatprep.subr.mxu0 0.0
        %699 = vmatpush1.msra.mxu0 0.0
        %700 = vmatprep.subr.mxu0 0.0
        %701 = vmatpush1.msra.mxu0 0.0
        %702 = vmatprep.subr.mxu0 0.0
        %703 = vmatpush1.msra.mxu0 0.0
        %704 = vmatprep.subr.mxu0 0.0
        %705 = vmatpush1.msra.mxu0 0.0
        %706 = vmatprep.subr.mxu0 0.0
        %707 = vmatpush1.msra.mxu0 0.0
        %708 = vmatprep.subr.mxu0 0.0
        %709 = vmatpush1.msra.mxu0 0.0
        %710 = vmatprep.subr.mxu0 0.0
        %711 = vmatpush1.msra.mxu0 0.0
        %712 = vmatprep.subr.mxu0 0.0
        %713 = vmatpush1.msra.mxu0 0.0
        %714 = vmatprep.subr.mxu0 0.0
        %715 = vmatpush1.msra.mxu0 0.0
        %716 = vmatprep.subr.mxu0 0.0
        %717 = vmatpush1.msra.mxu0 0.0
        %718 = vmatprep.subr.mxu0 0.0
        %719 = vmatpush1.msra.mxu0 0.0
        %720 = vmatprep.subr.mxu0 0.0
        %721 = vmatpush1.msra.mxu0 0.0
        %722 = vmatprep.subr.mxu0 0.0
        %723 = vmatpush1.msra.mxu0 0.0
        %724 = vmatprep.subr.mxu0 0.0
        %725 = vmatpush1.msra.mxu0 0.0
        %726 = vmatprep.subr.mxu0 0.0
        %727 = vmatpush1.msra.mxu0 0.0
        %728 = vmatprep.subr.mxu0 0.0
        %729 = vmatpush1.msra.mxu0 0.0
        %730 = vmatprep.subr.mxu0 0.0
        %731 = vmatpush1.msra.mxu0 0.0
        %732 = vmatprep.subr.mxu0 0.0
        %733 = vmatpush1.msra.mxu0 0.0
        %734 = vmatprep.subr.mxu0 0.0
        %735 = vmatpush1.msra.mxu0 0.0
        %736 = vmatprep.mubr.f32.mxu0 0.0
        %737 = vmatmul.mubr.f32.gmra.mrb[0].mxu0 %v670
        %v738 = vpop.f32.mrb[0].mxu0
        %v739 = vadd.f32 %v666, %v738
        %v740 = vpop.f32.mrb[0].mxu0
        %741 = vdwg.mxu0
        %s742 = scalar_lea.vmem %s11, 8
        %v743 = vld [vmem:[%s742] sm:$0xff]
        %v744 = vxor.u32 %v739, 2147483648
        %v745 = vmul.f32 %v744, 1.442695
        %v746 = vpow.pop %v745
        %v747 = vadd.f32 %v746, 1.0
        %v748 = vrcp.pop %v747
        %v749 = vmul.f32 1.0, %v748
        %v750 = vtanh.pop %v739
        %752 = vrot.lane.b32.xlu0 %v743, 32
        %v753 = vpop.permute.xlu0 %752
        %v755 = vmul.f32 %v749, %v753
        %757 = vrot.lane.b32.xlu0 %v750, 32
        %v758 = vpop.permute.xlu0 %757
        %v760 = vmul.f32 %v749, %v758
        %762 = vrot.lane.b32.xlu0 %v760, 32
        %v763 = vpop.permute.xlu0 %762
        %v765 = vadd.f32 %v755, %v763
        %v766 = vtanh.pop %v765
        %768 = vrot.lane.b32.xlu0 %v766, 32
        %v769 = vpop.permute.xlu0 %768
        %v771 = vmul.f32 %v749, %v769
        %773 = vrot.lane.b32.xlu0 %v771, 64
        %v774 = vpop.permute.xlu0 %773
        %776 = vst.msk [vmem:[%s646] sm:$0xff] %vm455, %v774
        %778 = vrot.lane.b32.xlu0 %v765, 96
        %v779 = vpop.permute.xlu0 %778
        %781 = vst.msk [vmem:[%s742] sm:$0xff] %vm455, %v779
        %v782 = vld [vmem:[#allocation7] sm:$0xff]
        %v783 = vld [vmem:[#allocation7 + $0x8] sm:$0xff]
        %v784 = vld [vmem:[#allocation7 + $0x10] sm:$0xff]
        %v785 = vld [vmem:[#allocation7 + $0x18] sm:$0xff]
        %v786 = vld [vmem:[%s8] sm:$0x1]
        %v788 = vlaneseq
        %v789 = vshrl.u32 %v788, 7
        %v790 = vsub.s32 0, %v789
        %v791 = vrot.slane %v786, %v790
        %v793 = vsel %vm455, %v774, 0
        %795 = vmatprep.subr.mxu0 0.0
        %796 = vmatpush1.msra.mxu0 %v782
        %797 = vmatprep.subr.mxu0 0.0
        %798 = vmatpush1.msra.mxu0 %v783
        %799 = vmatprep.subr.mxu0 0.0
        %800 = vmatpush1.msra.mxu0 %v784
        %801 = vmatprep.subr.mxu0 0.0
        %802 = vmatpush1.msra.mxu0 %v785
        %803 = vmatprep.subr.mxu0 0.0
        %804 = vmatpush1.msra.mxu0 0.0
        %805 = vmatprep.subr.mxu0 0.0
        %806 = vmatpush1.msra.mxu0 0.0
        %807 = vmatprep.subr.mxu0 0.0
        %808 = vmatpush1.msra.mxu0 0.0
        %809 = vmatprep.subr.mxu0 0.0
        %810 = vmatpush1.msra.mxu0 0.0
        %811 = vmatprep.subr.mxu0 0.0
        %812 = vmatpush1.msra.mxu0 0.0
        %813 = vmatprep.subr.mxu0 0.0
        %814 = vmatpush1.msra.mxu0 0.0
        %815 = vmatprep.subr.mxu0 0.0
        %816 = vmatpush1.msra.mxu0 0.0
        %817 = vmatprep.subr.mxu0 0.0
        %818 = vmatpush1.msra.mxu0 0.0
        %819 = vmatprep.subr.mxu0 0.0
        %820 = vmatpush1.msra.mxu0 0.0
        %821 = vmatprep.subr.mxu0 0.0
        %822 = vmatpush1.msra.mxu0 0.0
        %823 = vmatprep.subr.mxu0 0.0
        %824 = vmatpush1.msra.mxu0 0.0
        %825 = vmatprep.subr.mxu0 0.0
        %826 = vmatpush1.msra.mxu0 0.0
        %827 = vmatprep.subr.mxu0 0.0
        %828 = vmatpush1.msra.mxu0 0.0
        %829 = vmatprep.subr.mxu0 0.0
        %830 = vmatpush1.msra.mxu0 0.0
        %831 = vmatprep.subr.mxu0 0.0
        %832 = vmatpush1.msra.mxu0 0.0
        %833 = vmatprep.subr.mxu0 0.0
        %834 = vmatpush1.msra.mxu0 0.0
        %835 = vmatprep.subr.mxu0 0.0
        %836 = vmatpush1.msra.mxu0 0.0
        %837 = vmatprep.subr.mxu0 0.0
        %838 = vmatpush1.msra.mxu0 0.0
        %839 = vmatprep.subr.mxu0 0.0
        %840 = vmatpush1.msra.mxu0 0.0
        %841 = vmatprep.subr.mxu0 0.0
        %842 = vmatpush1.msra.mxu0 0.0
        %843 = vmatprep.subr.mxu0 0.0
        %844 = vmatpush1.msra.mxu0 0.0
        %845 = vmatprep.subr.mxu0 0.0
        %846 = vmatpush1.msra.mxu0 0.0
        %847 = vmatprep.subr.mxu0 0.0
        %848 = vmatpush1.msra.mxu0 0.0
        %849 = vmatprep.subr.mxu0 0.0
        %850 = vmatpush1.msra.mxu0 0.0
        %851 = vmatprep.subr.mxu0 0.0
        %852 = vmatpush1.msra.mxu0 0.0
        %853 = vmatprep.subr.mxu0 0.0
        %854 = vmatpush1.msra.mxu0 0.0
        %855 = vmatprep.subr.mxu0 0.0
        %856 = vmatpush1.msra.mxu0 0.0
        %857 = vmatprep.subr.mxu0 0.0
        %858 = vmatpush1.msra.mxu0 0.0
        %859 = vmatprep.mubr.f32.mxu0 0.0
        %860 = vmatmul.mubr.f32.gmra.mrb[0].mxu0 %v793
        %v861 = vpop.f32.mrb[0].mxu0
        %v862 = vadd.f32 %v791, %v861
        %v863 = vpop.f32.mrb[0].mxu0
        %864 = vdwg.mxu0
        %865 = vst [vmem:[%s412] sm:$0xff] %v862
        %s866 = sand.u32 %s230, 1
        %s867 = scalar_lea.sflag [#allocation4], %s866
        %s868 = sand.u32 %s230, 1
        %s869 = smul.addr %s868, 8
        %s870 = scalar_lea.vmem [#allocation8], %s869
        // Predicated region
        $region73: #{decoder_generate.1} parent=55 // pred_check
          %p871 = pneg %p240
        $region74: #{decoder_generate.1} parent=55 // pred_check_branch
          %873 = sbr.rel (%p871) target = $region76
        $region75: #{decoder_generate.1} parent=55 // pred_region
          %s875 = ssub.s32 128, 128
          %876 = vsyncadd %s867, %s875
          %s877 = smul.addr %s28, 128
          %s878 = scalar_lea.hbm %s9, %s877
          %s880 = sshll.u32 %s870, 4
          %s881 = int_to_ptr.vmem [resolvable:$true] %s880
          %883 = dma.vmem_to_hbm [thread:$0]  %s881, 128, %s878, %s867
        $region76: #{decoder_generate.1} parent=55 // pred_fallthru
          _
        // Predicated region
        $region77: #{decoder_generate.1} parent=55 // pred_check
          %p884 = pneg %p261
        $region78: #{decoder_generate.1} parent=55 // pred_check_branch
          %886 = sbr.rel (%p884) target = $region80
        $region79: #{decoder_generate.1} parent=55 // pred_region
          _
        $region80: #{decoder_generate.1} parent=55 // pred_fallthru
          _
        // Predicated region
        $region81: #{decoder_generate.1} parent=55 // pred_check
          %p887 = pneg %p282
        $region82: #{decoder_generate.1} parent=55 // pred_check_branch
          %889 = sbr.rel (%p887) target = $region84
        $region83: #{decoder_generate.1} parent=55 // pred_region
          _
        $region84: #{decoder_generate.1} parent=55 // pred_fallthru
          _
        // Predicated region
        $region85: #{decoder_generate.1} parent=55 // pred_check
          %p890 = pneg %p261
        $region86: #{decoder_generate.1} parent=55 // pred_check_branch
          %892 = sbr.rel (%p890) target = $region88
        $region87: #{decoder_generate.1} parent=55 // pred_region
          _
        $region88: #{decoder_generate.1} parent=55 // pred_fallthru
          _
        // Predicated region
        $region89: #{decoder_generate.1} parent=55 // pred_check
          %p893 = pneg %p282
        $region90: #{decoder_generate.1} parent=55 // pred_check_branch
          %895 = sbr.rel (%p893) target = $region92
        $region91: #{decoder_generate.1} parent=55 // pred_region
          _
        $region92: #{decoder_generate.1} parent=55 // pred_fallthru
          _
      $region56: #{decoder_generate.1} parent=5 // pred_fallthru
        _
      %p896 = scmp.le.s32.totalorder 2, %s23
      // Predicated region
      $region93: #{decoder_generate.1} parent=5 // pred_check
        %p897 = pneg %p896
      $region94: #{decoder_generate.1} parent=5 // pred_check_branch
        %899 = sbr.rel (%p897) target = $region96
      $region95: #{decoder_generate.1} parent=5 // pred_region
        %s900 = ssub.s32 %s23, 2
        // Predicated region
        $region97: #{decoder_generate.1} parent=95 // pred_check
          %p901 = pneg %p246
        $region98: #{decoder_generate.1} parent=95 // pred_check_branch
          %903 = sbr.rel (%p901) target = $region100
        $region99: #{decoder_generate.1} parent=95 // pred_region
          %s904 = sand.u32 %s231, 1
          %s905 = scalar_lea.sflag [#allocation4], %s904
          %s906 = sand.u32 %s231, 1
          %s907 = smul.addr %s906, 8
          %s908 = scalar_lea.vmem [#allocation8], %s907
          %909 = dma.done %s905, 128
        $region100: #{decoder_generate.1} parent=95 // pred_fallthru
          _
      $region96: #{decoder_generate.1} parent=5 // pred_fallthru
        _
    $region6: #{decoder_generate.1} parent=1 // loop_footer
      %s27 = sadd.s32 1, %s23
    $region7: #{decoder_generate.1} parent=1 // loop_footer_branch
      %22 = sbr.rel target = $region3
    $region8: #{decoder_generate.1} parent=1 // loop_exit
      _
    %910 = vsyncpa [#allocation3], 1
    %s911 = scalar_lea.sflag [#allocation3], 1
    %912 = vsyncpa %s911, 1
    %913 = vsyncpa [#allocation6], 1
    %914 = vsyncpa [#allocation4], 1
    %s915 = scalar_lea.sflag [#allocation4], 1
    %916 = vsyncpa %s915, 1

</llo_original>
